<compile_context>
chip_gen: v6e
topology: v6e:2x2x1
jax: 0.10.0
libtpu: 0.0.40
codegen_flags: <defaults>
</compile_context>

<pallas_src>
import numpy as np
import jax
import jax.numpy as jnp
from jax import lax
from jax.experimental import pallas as pl
from jax.experimental.pallas import tpu as pltpu

# v7x has 64 MiB physical VMEM per TC; leave pipeline headroom.
VMEM_BUDGET_BYTES = 48 * 1024 * 1024


# ---------------------------------------------------------------------------
# Small helpers (padding / packing, all trace-level JAX, outside the kernels).
# ---------------------------------------------------------------------------
def _round_up(n, m):
    return ((n + m - 1) // m) * m


def _pad_to(a, axis, size):
    if a.shape[axis] == size:
        return a
    pads = [(0, 0)] * a.ndim
    pads[axis] = (0, size - a.shape[axis])
    return jnp.pad(a, pads)


def _pad_gates(w, hp, axis):
    """Pad each of the 3 packed (r, z, n) gate blocks along `axis` to hp."""
    parts = jnp.split(w, 3, axis=axis)
    return jnp.concatenate([_pad_to(p, axis, hp) for p in parts], axis=axis)


# ---------------------------------------------------------------------------
# Generic row-tiled (optionally N-tiled) matmul + bias kernel.  Used for the
# hoisted per-layer input projection and for the regression head.
# ---------------------------------------------------------------------------
def matmul_bias_kernel(x_ref, w_ref, b_ref, o_ref):
    acc = jnp.dot(x_ref[...], w_ref[...], preferred_element_type=jnp.float32)
    o_ref[...] = (acc + b_ref[...]).astype(o_ref.dtype)


def matmul_bias(x2d, w, b, *, out_dtype=jnp.float32, block_rows=256,
                block_cols=512, vmem_limit_bytes=VMEM_BUDGET_BYTES):
    N, D = x2d.shape
    O = w.shape[-1]
    bn = block_rows if N > block_rows else N            # full, or multiple of 8
    tile_n = (O > block_cols) and (O % block_cols == 0)
    to = block_cols if tile_n else O
    grid = (pl.cdiv(N, bn), pl.cdiv(O, to))

    if tile_n:
        # Weight tiled along N: index varies with j -> keep double buffering.
        w_spec = pl.BlockSpec((D, to), lambda i, j: (0, j))
        b_spec = pl.BlockSpec((1, to), lambda i, j: (0, j))
    else:
        # Constant-index weight/bias: single-buffer to halve their VMEM.
        w_spec = pl.BlockSpec((D, O), lambda i, j: (0, 0),
                              pipeline_mode=pl.Buffered(1))
        b_spec = pl.BlockSpec((1, O), lambda i, j: (0, 0),
                              pipeline_mode=pl.Buffered(1))

    return pl.pallas_call(
        matmul_bias_kernel,
        out_shape=jax.ShapeDtypeStruct((N, O), out_dtype),
        grid_spec=pltpu.PrefetchScalarGridSpec(
            num_scalar_prefetch=0,
            grid=grid,
            in_specs=[pl.BlockSpec((bn, D), lambda i, j: (i, 0)),
                      w_spec, b_spec],
            out_specs=pl.BlockSpec((bn, to), lambda i, j: (i, j)),
        ),
        compiler_params=pltpu.CompilerParams(
            dimension_semantics=("parallel", "parallel"),
            vmem_limit_bytes=vmem_limit_bytes),
    )(x2d, w, b)


# ---------------------------------------------------------------------------
# GRU recurrence kernel.  xp is the precomputed input projection (b_ih and the
# r/z thirds of b_hh already folded in), streamed in time chunks of Tc steps.
# Only h @ W_hh runs per step; the f32 hidden state lives in a VMEM scratch
# and carries across time chunks.
# ---------------------------------------------------------------------------
def gru_recur_kernel(xp_ref, whh_ref, bhhn_ref, y_ref, h_ref):
    Tc, BB, _ = xp_ref.shape
    H = h_ref.shape[-1]
    mxu_dtype = whh_ref.dtype

    # Fresh hidden state at the first time chunk of every batch tile; the
    # scratch then carries h across the inner ("arbitrary") time-chunk axis.
    @pl.when(pl.program_id(1) == 0)
    def _():
        h_ref[...] = jnp.zeros_like(h_ref)

    # Hoist the n-gate bias broadcast out of the serial loop (JAX does not CSE
    # broadcast_in_dim); the r/z thirds of b_hh were folded into b_ih already.
    bhh_n = pl.broadcast_to(bhhn_ref[...], (BB, H))

    def step(t, carry):
        h = h_ref[...]                                           # (BB, H) f32
        gi = xp_ref[t].astype(jnp.float32)                       # (BB, 3H)
        gh = jnp.dot(h.astype(mxu_dtype), whh_ref[...],
                     preferred_element_type=jnp.float32)         # (BB, 3H)
        r = jax.nn.sigmoid(gi[:, :H] + gh[:, :H])
        z = jax.nn.sigmoid(gi[:, H:2 * H] + gh[:, H:2 * H])
        n = jnp.tanh(gi[:, 2 * H:] + r * (gh[:, 2 * H:] + bhh_n))
        h_new = (1.0 - z) * n + z * h                            # f32 carry
        h_ref[...] = h_new
        y_ref[t] = h_new.astype(y_ref.dtype)                     # lane-dense
        return carry

    # Small fixed unroll even for long chunks: exposes the next step's xp load
    # and the previous step's y store across the MXU->EUP->VPU latency chain.
    unroll = Tc if Tc <= 8 else 4
    lax.fori_loop(0, Tc, step, 0, unroll=unroll)


def gru_recurrence(xp, w_hh, b_hh_n, *, out_dtype=jnp.float32, batch_tiles=1,
                   vmem_budget_bytes=VMEM_BUDGET_BYTES):
    S, B, threeH = xp.shape
    H = w_hh.shape[0]
    assert threeH == 3 * H
    assert B % batch_tiles == 0, "batch_tiles must divide the (padded) batch"
    BB = B // batch_tiles
    assert BB == B or BB % 8 == 0, "batch tile must be a multiple of 8 sublanes"

    # Pick the time-chunk size so double-buffered xp/y chunks + single-buffered
    # weights + h scratch fit the VMEM budget, independent of S.
    xp_b = jnp.dtype(xp.dtype).itemsize
    y_b = jnp.dtype(out_dtype).itemsize
    fixed = (w_hh.size * jnp.dtype(w_hh.dtype).itemsize
             + b_hh_n.size * 4 + BB * H * 4)
    per_t = 2 * BB * (threeH * xp_b + H * y_b)
    tc = int(max(1, min(S, (vmem_budget_bytes - fixed) // max(per_t, 1))))
    while S % tc:          # keep chunks exact (no padded tail timesteps)
        tc -= 1

    grid = (batch_tiles, S // tc)
    return pl.pallas_call(
        gru_recur_kernel,
        out_shape=jax.ShapeDtypeStruct((S, B, H), out_dtype),
        grid_spec=pltpu.PrefetchScalarGridSpec(
            num_scalar_prefetch=0,
            grid=grid,
            in_specs=[
                pl.BlockSpec((tc, BB, threeH), lambda b, t: (t, b, 0)),
                pl.BlockSpec((H, threeH), lambda b, t: (0, 0),
                             pipeline_mode=pl.Buffered(1)),
                pl.BlockSpec((1, H), lambda b, t: (0, 0),
                             pipeline_mode=pl.Buffered(1)),
            ],
            out_specs=pl.BlockSpec((tc, BB, H), lambda b, t: (t, b, 0)),
            scratch_shapes=[pltpu.VMEM((BB, H), jnp.float32)],
        ),
        compiler_params=pltpu.CompilerParams(
            dimension_semantics=("parallel", "arbitrary"),
            vmem_limit_bytes=vmem_budget_bytes),
    )(xp, w_hh, b_hh_n)


# ---------------------------------------------------------------------------
# Parameter preparation: pad each gate block to 128 lanes, pad the head output
# dim to 128, fold the r/z thirds of b_hh into b_ih, cast MXU operand tensors
# to `mxu_dtype` (bf16 on v6e/v7x, f32 otherwise).  All padding is with zeros,
# which leaves the real lanes bit-for-bit unchanged.
# ---------------------------------------------------------------------------
def prepare_params(params, *, mxu_dtype=jnp.float32, lane_align=128):
    H = params["gru"][0][1].shape[0]
    Hp = _round_up(H, lane_align)
    out_dim = params["w_reg"].shape[-1]
    Op = _round_up(out_dim, lane_align)

    layers = []
    for li, (w_ih, w_hh, b_ih, b_hh) in enumerate(params["gru"]):
        d_in = w_ih.shape[0]
        d_in_p = d_in if li == 0 else Hp          # layer>0 consumes padded hidden
        # Fold b_hh_r / b_hh_z into b_ih; b_hh_n must stay inside r*(...).
        b_fold = jnp.concatenate(
            [b_ih[:, :2 * H] + b_hh[:, :2 * H], b_ih[:, 2 * H:]], axis=1)
        layers.append(dict(
            w_ih=_pad_gates(_pad_to(w_ih, 0, d_in_p), Hp, 1).astype(mxu_dtype),
            b_ih=_pad_gates(b_fold, Hp, 1).astype(jnp.float32),
            w_hh=_pad_gates(_pad_to(w_hh, 0, Hp), Hp, 1).astype(mxu_dtype),
            b_hh_n=_pad_to(b_hh[:, 2 * H:], 1, Hp).astype(jnp.float32),
        ))
    return dict(
        gru=layers,
        w_reg=_pad_to(_pad_to(params["w_reg"], 0, Hp), 1, Op).astype(mxu_dtype),
        b_reg=_pad_to(params["b_reg"], 1, Op).astype(jnp.float32),
        out_dim=out_dim,
        mxu_dtype=mxu_dtype)


# ---------------------------------------------------------------------------
# RegGRU forward: per layer, one big input-projection matmul + one recurrence
# kernel; then the Linear head over the flattened (S*B, H) activations.
# batch_tiles=1 for v5e/v6e (single TC); set 2 on v7x to use both TCs.
# ---------------------------------------------------------------------------
def reg_gru_forward(x, prepped, *, batch_tiles=1, sublane_align=8,
                    vmem_budget_bytes=VMEM_BUDGET_BYTES):
    mxu_dtype = prepped["mxu_dtype"]
    S, B, _ = x.shape

    # Pad batch so every batch tile is a full sublane group.
    Bp = _round_up(B, sublane_align * batch_tiles)
    h_all = _pad_to(x.astype(jnp.float32), 1, Bp)

    for layer in prepped["gru"]:
        S_, Bp_, Din = h_all.shape
        Hp = layer["w_hh"].shape[0]
        # Hoisted, time-independent projection for ALL timesteps at once.
        xp = matmul_bias(h_all.reshape(S_ * Bp_, Din).astype(mxu_dtype),
                         layer["w_ih"], layer["b_ih"], out_dtype=mxu_dtype,
                         vmem_limit_bytes=vmem_budget_bytes)
        xp = xp.reshape(S_, Bp_, 3 * Hp)
        # Serial recurrence: whole time loop inside one kernel, f32 h in VMEM.
        h_all = gru_recurrence(xp, layer["w_hh"], layer["b_hh_n"],
                               out_dtype=mxu_dtype, batch_tiles=batch_tiles,
                               vmem_budget_bytes=vmem_budget_bytes)

    S_, Bp_, Hp = h_all.shape
    y = matmul_bias(h_all.reshape(S_ * Bp_, Hp).astype(mxu_dtype),
                    prepped["w_reg"], prepped["b_reg"], out_dtype=jnp.float32,
                    vmem_limit_bytes=vmem_budget_bytes)
    y = y.reshape(S_, Bp_, -1)
    return y[:, :B, :prepped["out_dim"]]


# ---------------------------------------------------------------------------
# Deterministic parameter init (PyTorch layout, transposed for right-multiply:
# w_ih (D, 3H), w_hh (H, 3H), biases (1, 3H), gate order (r, z, n)).
# ---------------------------------------------------------------------------
def init_params(key, inp_dim, out_dim, mod_dim, mid_layers):
    params = {"gru": []}
    scale = 1.0 / np.sqrt(mod_dim)
    for layer in range(mid_layers):
        d_in = inp_dim if layer == 0 else mod_dim
        key, k1, k2, k3, k4 = jax.random.split(key, 5)
        w_ih = jax.random.uniform(k1, (d_in, 3 * mod_dim), jnp.float32, -scale, scale)
        w_hh = jax.random.uniform(k2, (mod_dim, 3 * mod_dim), jnp.float32, -scale, scale)
        b_ih = jax.random.uniform(k3, (1, 3 * mod_dim), jnp.float32, -scale, scale)
        b_hh = jax.random.uniform(k4, (1, 3 * mod_dim), jnp.float32, -scale, scale)
        params["gru"].append((w_ih, w_hh, b_ih, b_hh))
    key, k5, k6 = jax.random.split(key, 3)
    params["w_reg"] = jax.random.uniform(k5, (mod_dim, out_dim), jnp.float32, -scale, scale)
    params["b_reg"] = jax.random.uniform(k6, (1, out_dim), jnp.float32, -scale, scale)
    return params


# ---------------------------------------------------------------------------
# Pure-JAX f32 reference (mirrors PyTorch GRU math) for correctness checks.
# ---------------------------------------------------------------------------
def reg_gru_reference(x, params):
    h_all = x
    for (w_ih, w_hh, b_ih, b_hh) in params["gru"]:
        S, B, _ = h_all.shape
        H = w_hh.shape[0]
        h = jnp.zeros((B, H), jnp.float32)
        outs = []
        for t in range(S):
            xt = h_all[t]
            gi = xt @ w_ih + b_ih
            gh = h @ w_hh + b_hh
            r = jax.nn.sigmoid(gi[:, :H] + gh[:, :H])
            z = jax.nn.sigmoid(gi[:, H:2 * H] + gh[:, H:2 * H])
            n = jnp.tanh(gi[:, 2 * H:] + r * gh[:, 2 * H:])
            h = (1.0 - z) * n + z * h
            outs.append(h)
        h_all = jnp.stack(outs, axis=0)
    S, B, H = h_all.shape
    y = h_all.reshape(S * B, H) @ params["w_reg"] + params["b_reg"]
    return y.reshape(S, B, -1)


if __name__ == "__main__":
    SEQ, BATCH = 8, 4
    INP_DIM, OUT_DIM, MOD_DIM, MID_LAYERS = 16, 8, 32, 2

    key = jax.random.PRNGKey(0)
    key, kx, kp = jax.random.split(key, 3)
    x = jax.random.normal(kx, (SEQ, BATCH, INP_DIM), jnp.float32)
    params = init_params(kp, INP_DIM, OUT_DIM, MOD_DIM, MID_LAYERS)

    ref = np.asarray(reg_gru_reference(x, params))

    # f32 MXU path: padding is with zeros, so this matches the f32 reference.
    out_f32 = jax.block_until_ready(
        reg_gru_forward(x, prepare_params(params, mxu_dtype=jnp.float32)))
    assert out_f32.shape == (SEQ, BATCH, OUT_DIM)
    np.testing.assert_allclose(np.asarray(out_f32), ref, rtol=2e-4, atol=2e-4)

    # bf16-operand MXU path (v6e/v7x optimization): hidden state and gate math
    # stay f32, only matmul operands / streamed activations are bf16.  Checked
    # with a loose norm-based bound (bf16 rounding, not a layout/folding bug).
    out_bf16 = np.asarray(jax.block_until_ready(
        reg_gru_forward(x, prepare_params(params, mxu_dtype=jnp.bfloat16))))
    assert out_bf16.shape == (SEQ, BATCH, OUT_DIM)
    assert np.all(np.isfinite(out_bf16))
    rel_l2 = np.linalg.norm(out_bf16 - ref) / (np.linalg.norm(ref) + 1e-12)
    assert rel_l2 < 0.25, f"bf16 path diverged from reference: rel_l2={rel_l2}"

    print("KERNEL_OK")
</pallas_src>

<mosaic_0001>
module attributes {stable_mosaic.version = 11 : i64} {
  func.func @matmul_bias_kernel(%arg0: i32, %arg1: i32, %arg2: memref<64x16xf32, #tpu.memory_space<vmem>>, %arg3: memref<16x384xf32, #tpu.memory_space<vmem>>, %arg4: memref<1x384xf32, #tpu.memory_space<vmem>>, %arg5: memref<64x384xf32, #tpu.memory_space<vmem>>) attributes {dimension_semantics = [#tpu.dimension_semantics<parallel>, #tpu.dimension_semantics<parallel>], iteration_bounds = array<i64: 1, 1>, scalar_prefetch = 0 : i64, scratch_operands = 0 : i64, tpu.core_type = #tpu.core_type<tc>, window_params = [{transform_indices = @transform_0, window_bounds = array<i64: 64, 16>}, {pipeline_mode = #tpu.pipeline_mode<synchronous>, transform_indices = @transform_1, window_bounds = array<i64: 16, 384>}, {pipeline_mode = #tpu.pipeline_mode<synchronous>, transform_indices = @transform_2, window_bounds = array<i64: 1, 384>}, {transform_indices = @transform_3, window_bounds = array<i64: 64, 384>}]} {
    %c0 = arith.constant 0 : index
    %c0_0 = arith.constant 0 : index
    %0 = vector.load %arg2[%c0, %c0_0] : memref<64x16xf32, #tpu.memory_space<vmem>>, vector<64x16xf32>
    %c0_1 = arith.constant 0 : index
    %c0_2 = arith.constant 0 : index
    %1 = vector.load %arg3[%c0_1, %c0_2] : memref<16x384xf32, #tpu.memory_space<vmem>>, vector<16x384xf32>
    %cst = arith.constant dense<0.000000e+00> : vector<64x384xf32>
    %2 = tpu.matmul %0, %1, %cst {dimension_numbers = #tpu.dot_dimension_numbers<[1], [0], [0], [1], [0, 0, 1, 1], [], []>} : vector<64x16xf32>, vector<16x384xf32>, vector<64x384xf32> -> vector<64x384xf32>
    %c0_3 = arith.constant 0 : index
    %c0_4 = arith.constant 0 : index
    %3 = vector.load %arg4[%c0_3, %c0_4] : memref<1x384xf32, #tpu.memory_space<vmem>>, vector<1x384xf32>
    %4 = vector.broadcast %3 : vector<1x384xf32> to vector<64x384xf32>
    %5 = arith.addf %2, %4 : vector<64x384xf32>
    %c0_5 = arith.constant 0 : index
    %c0_6 = arith.constant 0 : index
    %6 = vector.load %arg5[%c0_5, %c0_6] : memref<64x384xf32, #tpu.memory_space<vmem>>, vector<64x384xf32>
    tpu.vector_store %arg5[%c0_5, %c0_6], %5 {strides = array<i32>} : memref<64x384xf32, #tpu.memory_space<vmem>>, vector<64x384xf32>,
    return
  }
  func.func @transform_0(%arg0: i32, %arg1: i32) -> (i32, i32) {
    %c0_i32 = arith.constant 0 : i32
    %c0_i32_0 = arith.constant 0 : i32
    return %arg0, %c0_i32 : i32, i32
  }
  func.func @transform_1(%arg0: i32, %arg1: i32) -> (i32, i32) {
    %c0_i32 = arith.constant 0 : i32
    %c0_i32_0 = arith.constant 0 : i32
    %c0_i32_1 = arith.constant 0 : i32
    return %c0_i32, %c0_i32_0 : i32, i32
  }
  func.func @transform_2(%arg0: i32, %arg1: i32) -> (i32, i32) {
    %c0_i32 = arith.constant 0 : i32
    %c0_i32_0 = arith.constant 0 : i32
    %c0_i32_1 = arith.constant 0 : i32
    return %c0_i32, %c0_i32_0 : i32, i32
  }
  func.func @transform_3(%arg0: i32, %arg1: i32) -> (i32, i32) {
    %c0_i32 = arith.constant 0 : i32
    return %arg0, %arg1 : i32, i32
  }
}

</mosaic_0001>

<llo_original>
// kernel: tpu_custom_call.1
$region0: #{tpu_custom_call.1}
  #allocation0 [shape = 'u32[]', space=smem, size = 0x4, offset = 0x4, fixed_abs, tag = 'smem constant byte address 0x4 - core index']
  #allocation1 [shape = 'u32[144,128]{1,0:T(1,128)}', space=vmem, size = 0x12000, scoped, tag = 'internal scratch']
  %s0 = inlined_call_operand.vmem [shape: f32[64,16], index: 0, kind: input, shape index: {}]
  %s1 = inlined_call_operand.vmem [shape: f32[16,384], index: 1, kind: input, shape index: {}]
  %s2 = inlined_call_operand.vmem [shape: f32[1,384], index: 2, kind: input, shape index: {}]
  %s3 = inlined_call_operand.hbm [shape: f32[64,384], index: 3, kind: output, shape index: {}]
  %s4 = sld [smem:[#allocation0]]
  $region22: #{tpu_custom_call.1} parent=0
    _
  %s6 = ssub.s32 1, %s4
  %s7 = scalar_select 0, %s6, %s4
  $region1: #{tpu_custom_call.1} parent=0
    #allocation2 [shape = 'u8[98304]{0}', space=vmem, size = 0x18000, scoped, tag = 'output window, operand 0, single buffered']
    #allocation3 [shape = 's32[1]{0}', space=sflag, size = 0x4, scoped, tag = 'scoped memory for tpu_custom_call.1']
    %8 = vsyncpa [#allocation3], 0
    // Predicated region
    $region2: #{tpu_custom_call.1} parent=1 // pred_check
      _
    $region3: #{tpu_custom_call.1} parent=1 // pred_check_branch
      %10 = sbr.rel (0) target = $region5
    $region4: #{tpu_custom_call.1} parent=1 // pred_region
      _
    $region5: #{tpu_custom_call.1} parent=1 // pred_fallthru
      _
    // Predicated region
    $region6: #{tpu_custom_call.1} parent=1 // pred_check
      _
    $region7: #{tpu_custom_call.1} parent=1 // pred_check_branch
      %12 = sbr.rel (0) target = $region9
    $region8: #{tpu_custom_call.1} parent=1 // pred_region
      _
    $region9: #{tpu_custom_call.1} parent=1 // pred_fallthru
      _
    // Predicated region
    $region10: #{tpu_custom_call.1} parent=1 // pred_check
      _
    $region11: #{tpu_custom_call.1} parent=1 // pred_check_branch
      %14 = sbr.rel (0) target = $region13
    $region12: #{tpu_custom_call.1} parent=1 // pred_region
      _
    $region13: #{tpu_custom_call.1} parent=1 // pred_fallthru
      _
    %v15 = vld [vmem:[%s0] sm:$0xff]
    %v16 = vld [vmem:[%s0 + $0x8] sm:$0xff]
    %v17 = vld [vmem:[%s0 + $0x10] sm:$0xff]
    %v18 = vld [vmem:[%s0 + $0x18] sm:$0xff]
    %v19 = vld [vmem:[%s0 + $0x20] sm:$0xff]
    %v20 = vld [vmem:[%s0 + $0x28] sm:$0xff]
    %v21 = vld [vmem:[%s0 + $0x30] sm:$0xff]
    %v22 = vld [vmem:[%s0 + $0x38] sm:$0xff]
    %v23 = vld [vmem:[%s1] sm:$0xff]
    %v24 = vld [vmem:[%s1 + $0x8] sm:$0xff]
    %v25 = vld [vmem:[%s1 + $0x10] sm:$0xff]
    %v26 = vld [vmem:[%s1 + $0x18] sm:$0xff]
    %v27 = vld [vmem:[%s1 + $0x20] sm:$0xff]
    %v28 = vld [vmem:[%s1 + $0x28] sm:$0xff]
    %v29 = vld [vmem:[%s2] sm:$0x7]
    %v31 = vlaneseq
    %v32 = vshrl.u32 %v31, 7
    %v33 = vsub.s32 0, %v32
    %v34 = vrot.slane %v29, %v33
    %v35 = vlaneseq
    %v36 = vshrl.u32 %v35, 7
    %v37 = vsub.s32 1, %v36
    %v38 = vrot.slane %v29, %v37
    %v39 = vlaneseq
    %v40 = vshrl.u32 %v39, 7
    %v41 = vsub.s32 2, %v40
    %v42 = vrot.slane %v29, %v41
    %vm46 = vcmask 130048
    %v48 = vsel %vm46, %v15, 0
    %v51 = vsel %vm46, %v16, 0
    %v54 = vsel %vm46, %v17, 0
    %v57 = vsel %vm46, %v18, 0
    %v60 = vsel %vm46, %v19, 0
    %v63 = vsel %vm46, %v20, 0
    %v66 = vsel %vm46, %v21, 0
    %v69 = vsel %vm46, %v22, 0
    %71 = vmatprep.subr.mxu0 0.0
    %72 = vmatpush1.msra.mxu0 0.0
    %73 = vmatprep.subr.mxu0 0.0
    %74 = vmatpush1.msra.mxu0 0.0
    %75 = vmatprep.subr.mxu0 0.0
    %76 = vmatpush1.msra.mxu0 0.0
    %77 = vmatprep.subr.mxu0 0.0
    %78 = vmatpush1.msra.mxu0 0.0
    %79 = vmatprep.subr.mxu0 0.0
    %80 = vmatpush1.msra.mxu0 0.0
    %81 = vmatprep.subr.mxu0 0.0
    %82 = vmatpush1.msra.mxu0 0.0
    %83 = vmatprep.subr.mxu0 0.0
    %84 = vmatpush1.msra.mxu0 0.0
    %85 = vmatprep.subr.mxu0 0.0
    %86 = vmatpush1.msra.mxu0 0.0
    %87 = vmatprep.subr.mxu0 0.0
    %88 = vmatpush1.msra.mxu0 0.0
    %89 = vmatprep.subr.mxu0 0.0
    %90 = vmatpush1.msra.mxu0 0.0
    %91 = vmatprep.subr.mxu0 0.0
    %92 = vmatpush1.msra.mxu0 0.0
    %93 = vmatprep.subr.mxu0 0.0
    %94 = vmatpush1.msra.mxu0 0.0
    %95 = vmatprep.subr.mxu0 0.0
    %96 = vmatpush1.msra.mxu0 0.0
    %97 = vmatprep.subr.mxu0 0.0
    %98 = vmatpush1.msra.mxu0 0.0
    %99 = vmatprep.subr.mxu0 %v27
    %100 = vmatpush1.msra.mxu0 %v26
    %101 = vmatprep.subr.mxu0 %v24
    %102 = vmatpush1.msra.mxu0 %v23
    %103 = vmatprep.subr.mxu0 0.0
    %104 = vmatpush2.msra.mxu0 0.0
    %105 = vmatprep.subr.mxu0 0.0
    %106 = vmatpush2.msra.mxu0 0.0
    %107 = vmatprep.subr.mxu0 0.0
    %108 = vmatpush2.msra.mxu0 0.0
    %109 = vmatprep.subr.mxu0 0.0
    %110 = vmatpush2.msra.mxu0 0.0
    %111 = vmatprep.subr.mxu0 0.0
    %112 = vmatpush2.msra.mxu0 0.0
    %113 = vmatprep.subr.mxu0 0.0
    %114 = vmatpush2.msra.mxu0 0.0
    %115 = vmatprep.subr.mxu0 0.0
    %116 = vmatpush2.msra.mxu0 0.0
    %117 = vmatprep.subr.mxu0 0.0
    %118 = vmatpush2.msra.mxu0 0.0
    %119 = vmatprep.subr.mxu0 0.0
    %120 = vmatpush2.msra.mxu0 0.0
    %121 = vmatprep.subr.mxu0 0.0
    %122 = vmatpush2.msra.mxu0 0.0
    %123 = vmatprep.subr.mxu0 0.0
    %124 = vmatpush2.msra.mxu0 0.0
    %125 = vmatprep.subr.mxu0 0.0
    %126 = vmatpush2.msra.mxu0 0.0
    %127 = vmatprep.subr.mxu0 0.0
    %128 = vmatpush2.msra.mxu0 0.0
    %129 = vmatprep.subr.mxu0 0.0
    %130 = vmatpush2.msra.mxu0 0.0
    %131 = vmatprep.subr.mxu0 0.0
    %132 = vmatpush2.msra.mxu0 0.0
    %133 = vmatprep.subr.mxu0 0.0
    %134 = vmatpush2.msra.mxu0 0.0
    %135 = vmatprep.mubr.f32.mxu0 0.0
    %136 = vmatmul.mubr.f32.gmra.mxu0 %v48
    %v137 = vpop.f32.mrf.mxu0
    %v138 = vadd.f32 %v34, %v137
    %v139 = vpop.f32.mrf.mxu0
    %v140 = vadd.f32 %v38, %v139
    %141 = vmatprep.mubr.f32.mxu0 0.0
    %142 = vmatmul.mubr.f32.gmra.mxu0 %v51
    %v143 = vpop.f32.mrf.mxu0
    %v144 = vadd.f32 %v34, %v143
    %v145 = vpop.f32.mrf.mxu0
    %v146 = vadd.f32 %v38, %v145
    %147 = vmatprep.mubr.f32.mxu0 0.0
    %148 = vmatmul.mubr.f32.gmra.mxu0 %v54
    %v149 = vpop.f32.mrf.mxu0
    %v150 = vadd.f32 %v34, %v149
    %v151 = vpop.f32.mrf.mxu0
    %v152 = vadd.f32 %v38, %v151
    %153 = vmatprep.mubr.f32.mxu0 0.0
    %154 = vmatmul.mubr.f32.gmra.mxu0 %v57
    %v155 = vpop.f32.mrf.mxu0
    %v156 = vadd.f32 %v34, %v155
    %v157 = vpop.f32.mrf.mxu0
    %v158 = vadd.f32 %v38, %v157
    %159 = vmatprep.mubr.f32.mxu0 0.0
    %160 = vmatmul.mubr.f32.gmra.mxu0 %v60
    %v161 = vpop.f32.mrf.mxu0
    %v162 = vadd.f32 %v34, %v161
    %v163 = vpop.f32.mrf.mxu0
    %v164 = vadd.f32 %v38, %v163
    %165 = vmatprep.mubr.f32.mxu0 0.0
    %166 = vmatmul.mubr.f32.gmra.mxu0 %v63
    %v167 = vpop.f32.mrf.mxu0
    %v168 = vadd.f32 %v34, %v167
    %v169 = vpop.f32.mrf.mxu0
    %v170 = vadd.f32 %v38, %v169
    %171 = vmatprep.mubr.f32.mxu0 0.0
    %172 = vmatmul.mubr.f32.gmra.mxu0 %v66
    %v173 = vpop.f32.mrf.mxu0
    %v174 = vadd.f32 %v34, %v173
    %v175 = vpop.f32.mrf.mxu0
    %v176 = vadd.f32 %v38, %v175
    %177 = vmatprep.mubr.f32.mxu0 0.0
    %178 = vmatmul.mubr.f32.gmra.mxu0 %v69
    %v179 = vpop.f32.mrf.mxu0
    %v180 = vadd.f32 %v34, %v179
    %v181 = vpop.f32.mrf.mxu0
    %v182 = vadd.f32 %v38, %v181
    %183 = vdwg.mxu0
    %184 = vmatprep.subr.mxu0 0.0
    %185 = vmatpush1.msra.mxu0 0.0
    %186 = vmatprep.subr.mxu0 0.0
    %187 = vmatpush1.msra.mxu0 0.0
    %188 = vmatprep.subr.mxu0 0.0
    %189 = vmatpush1.msra.mxu0 0.0
    %190 = vmatprep.subr.mxu0 0.0
    %191 = vmatpush1.msra.mxu0 0.0
    %192 = vmatprep.subr.mxu0 0.0
    %193 = vmatpush1.msra.mxu0 0.0
    %194 = vmatprep.subr.mxu0 0.0
    %195 = vmatpush1.msra.mxu0 0.0
    %196 = vmatprep.subr.mxu0 0.0
    %197 = vmatpush1.msra.mxu0 0.0
    %198 = vmatprep.subr.mxu0 0.0
    %199 = vmatpush1.msra.mxu0 0.0
    %200 = vmatprep.subr.mxu0 0.0
    %201 = vmatpush1.msra.mxu0 0.0
    %202 = vmatprep.subr.mxu0 0.0
    %203 = vmatpush1.msra.mxu0 0.0
    %204 = vmatprep.subr.mxu0 0.0
    %205 = vmatpush1.msra.mxu0 0.0
    %206 = vmatprep.subr.mxu0 0.0
    %207 = vmatpush1.msra.mxu0 0.0
    %208 = vmatprep.subr.mxu0 0.0
    %209 = vmatpush1.msra.mxu0 0.0
    %210 = vmatprep.subr.mxu0 0.0
    %211 = vmatpush1.msra.mxu0 0.0
    %212 = vmatprep.subr.mxu0 0.0
    %213 = vmatpush1.msra.mxu0 %v28
    %214 = vmatprep.subr.mxu0 0.0
    %215 = vmatpush1.msra.mxu0 %v25
    %216 = vmatprep.subr.mxu0 0.0
    %217 = vmatpush2.msra.mxu0 0.0
    %218 = vmatprep.subr.mxu0 0.0
    %219 = vmatpush2.msra.mxu0 0.0
    %220 = vmatprep.subr.mxu0 0.0
    %221 = vmatpush2.msra.mxu0 0.0
    %222 = vmatprep.subr.mxu0 0.0
    %223 = vmatpush2.msra.mxu0 0.0
    %224 = vmatprep.subr.mxu0 0.0
    %225 = vmatpush2.msra.mxu0 0.0
    %226 = vmatprep.subr.mxu0 0.0
    %227 = vmatpush2.msra.mxu0 0.0
    %228 = vmatprep.subr.mxu0 0.0
    %229 = vmatpush2.msra.mxu0 0.0
    %230 = vmatprep.subr.mxu0 0.0
    %231 = vmatpush2.msra.mxu0 0.0
    %232 = vmatprep.subr.mxu0 0.0
    %233 = vmatpush2.msra.mxu0 0.0
    %234 = vmatprep.subr.mxu0 0.0
    %235 = vmatpush2.msra.mxu0 0.0
    %236 = vmatprep.subr.mxu0 0.0
    %237 = vmatpush2.msra.mxu0 0.0
    %238 = vmatprep.subr.mxu0 0.0
    %239 = vmatpush2.msra.mxu0 0.0
    %240 = vmatprep.subr.mxu0 0.0
    %241 = vmatpush2.msra.mxu0 0.0
    %242 = vmatprep.subr.mxu0 0.0
    %243 = vmatpush2.msra.mxu0 0.0
    %244 = vmatprep.subr.mxu0 0.0
    %245 = vmatpush2.msra.mxu0 0.0
    %246 = vmatprep.subr.mxu0 0.0
    %247 = vmatpush2.msra.mxu0 0.0
    %248 = vmatprep.mubr.f32.mxu0 0.0
    %249 = vmatmul.mubr.f32.gmra.mxu0 %v48
    %v250 = vpop.f32.mrf.mxu0
    %v251 = vadd.f32 %v42, %v250
    %v252 = vpop.f32.mrf.mxu0
    %253 = vmatprep.mubr.f32.mxu0 0.0
    %254 = vmatmul.mubr.f32.gmra.mxu0 %v51
    %v255 = vpop.f32.mrf.mxu0
    %v256 = vadd.f32 %v42, %v255
    %v257 = vpop.f32.mrf.mxu0
    %258 = vmatprep.mubr.f32.mxu0 0.0
    %259 = vmatmul.mubr.f32.gmra.mxu0 %v54
    %v260 = vpop.f32.mrf.mxu0
    %v261 = vadd.f32 %v42, %v260
    %v262 = vpop.f32.mrf.mxu0
    %263 = vmatprep.mubr.f32.mxu0 0.0
    %264 = vmatmul.mubr.f32.gmra.mxu0 %v57
    %v265 = vpop.f32.mrf.mxu0
    %v266 = vadd.f32 %v42, %v265
    %v267 = vpop.f32.mrf.mxu0
    %268 = vmatprep.mubr.f32.mxu0 0.0
    %269 = vmatmul.mubr.f32.gmra.mxu0 %v60
    %v270 = vpop.f32.mrf.mxu0
    %v271 = vadd.f32 %v42, %v270
    %v272 = vpop.f32.mrf.mxu0
    %273 = vmatprep.mubr.f32.mxu0 0.0
    %274 = vmatmul.mubr.f32.gmra.mxu0 %v63
    %v275 = vpop.f32.mrf.mxu0
    %v276 = vadd.f32 %v42, %v275
    %v277 = vpop.f32.mrf.mxu0
    %278 = vmatprep.mubr.f32.mxu0 0.0
    %279 = vmatmul.mubr.f32.gmra.mxu0 %v66
    %v280 = vpop.f32.mrf.mxu0
    %v281 = vadd.f32 %v42, %v280
    %v282 = vpop.f32.mrf.mxu0
    %283 = vmatprep.mubr.f32.mxu0 0.0
    %284 = vmatmul.mubr.f32.gmra.mxu0 %v69
    %v285 = vpop.f32.mrf.mxu0
    %v286 = vadd.f32 %v42, %v285
    %v287 = vpop.f32.mrf.mxu0
    %288 = vdwg.mxu0
    %289 = vst [vmem:[#allocation2] sm:$0xff] %v138
    %290 = vst [vmem:[#allocation2 + $0x8] sm:$0xff] %v140
    %291 = vst [vmem:[#allocation2 + $0x10] sm:$0xff] %v251
    %292 = vst [vmem:[#allocation2 + $0x18] sm:$0xff] %v144
    %293 = vst [vmem:[#allocation2 + $0x20] sm:$0xff] %v146
    %294 = vst [vmem:[#allocation2 + $0x28] sm:$0xff] %v256
    %295 = vst [vmem:[#allocation2 + $0x30] sm:$0xff] %v150
    %296 = vst [vmem:[#allocation2 + $0x38] sm:$0xff] %v152
    %297 = vst [vmem:[#allocation2 + $0x40] sm:$0xff] %v261
    %298 = vst [vmem:[#allocation2 + $0x48] sm:$0xff] %v156
    %299 = vst [vmem:[#allocation2 + $0x50] sm:$0xff] %v158
    %300 = vst [vmem:[#allocation2 + $0x58] sm:$0xff] %v266
    %301 = vst [vmem:[#allocation2 + $0x60] sm:$0xff] %v162
    %302 = vst [vmem:[#allocation2 + $0x68] sm:$0xff] %v164
    %303 = vst [vmem:[#allocation2 + $0x70] sm:$0xff] %v271
    %304 = vst [vmem:[#allocation2 + $0x78] sm:$0xff] %v168
    %305 = vst [vmem:[#allocation2 + $0x80] sm:$0xff] %v170
    %306 = vst [vmem:[#allocation2 + $0x88] sm:$0xff] %v276
    %307 = vst [vmem:[#allocation2 + $0x90] sm:$0xff] %v174
    %308 = vst [vmem:[#allocation2 + $0x98] sm:$0xff] %v176
    %309 = vst [vmem:[#allocation2 + $0xa0] sm:$0xff] %v281
    %310 = vst [vmem:[#allocation2 + $0xa8] sm:$0xff] %v180
    %311 = vst [vmem:[#allocation2 + $0xb0] sm:$0xff] %v182
    %312 = vst [vmem:[#allocation2 + $0xb8] sm:$0xff] %v286
    // Predicated region
    $region14: #{tpu_custom_call.1} parent=1 // pred_check
      _
    $region15: #{tpu_custom_call.1} parent=1 // pred_check_branch
      %314 = sbr.rel (0) target = $region17
    $region16: #{tpu_custom_call.1} parent=1 // pred_region
      %s316 = ssub.s32 3072, 3072
      %317 = vsyncadd [#allocation3], %s316
      %s318 = sshll.u32 [#allocation2], 4
      %s319 = int_to_ptr.vmem [resolvable:$true] %s318
      %324 = dma.vmem_to_hbm [thread:$0]  %s319, 3072, %s3, [#allocation3], 384, 384, 24
    $region17: #{tpu_custom_call.1} parent=1 // pred_fallthru
      _
    // Predicated region
    $region18: #{tpu_custom_call.1} parent=1 // pred_check
      _
    $region19: #{tpu_custom_call.1} parent=1 // pred_check_branch
      %326 = sbr.rel (0) target = $region21
    $region20: #{tpu_custom_call.1} parent=1 // pred_region
      %327 = dma.done [#allocation3], 3072
    $region21: #{tpu_custom_call.1} parent=1 // pred_fallthru
      _
    %328 = vsyncpa [#allocation3], 1

</llo_original>
